<compile_context>
chip_gen: v7x
topology: tpu7x:2x2x1
jax: 0.10.0
libtpu: 0.0.40
codegen_flags: <defaults>
</compile_context>

<pallas_src>
import functools

import numpy as np
import jax
import jax.numpy as jnp
from jax import lax
from jax.experimental import pallas as pl
from jax.experimental.pallas import tpu as pltpu


def _round_up(n, m):
    return ((n + m - 1) // m) * m


@functools.lru_cache(maxsize=None)
def _roll_shift_is_forward():
    """Resolve pltpu.roll's lane-rotation sign once per process.

    Replaces the old in-kernel probe: one tiny pallas_call runs once (cached),
    and the resulting Python bool is baked into the main kernel at trace time,
    so the hot path issues exactly one XLU roll per prefix-sum step.
    """
    def probe_kernel(x_ref, o_ref):
        o_ref[...] = pltpu.roll(x_ref[...], 1, axis=1)

    x = jnp.broadcast_to(jnp.arange(128, dtype=jnp.float32), (8, 128))
    y = pl.pallas_call(
        probe_kernel,
        out_shape=jax.ShapeDtypeStruct((8, 128), jnp.float32),
    )(x)
    y = np.asarray(jax.block_until_ready(y))
    xn = np.asarray(x)
    if np.array_equal(y, np.roll(xn, 1, axis=1)):
        return True                      # out[:, j] = in[:, j - shift]
    if np.array_equal(y, np.roll(xn, -1, axis=1)):
        return False                     # out[:, j] = in[:, j + shift]
    raise NotImplementedError("unexpected pltpu.roll lane-rotation semantics")


def _fitted_warp_kernel(tmp1_ref, x_ref, o_ref, t_mat_ref, *,
                        seq_len, roll_fwd):
    """Grid = (batch, feature-tile).  trans_mat built once per batch element."""
    d_idx = pl.program_id(1)

    @pl.when(d_idx == 0)
    def _build_trans_mat():
        sp = tmp1_ref.shape[-1]              # padded sequence length (lanes)
        n_rows = t_mat_ref.shape[0]          # padded output rows (sublanes)

        s_row = tmp1_ref[...]                # (1, Sp) f32, lane-oriented x @ w
        a_row = 1.0 / (1.0 + jnp.exp(-s_row))   # sigmoid (EUP)
        # Padded lanes need no masking: any trans_mat entries they create end
        # up multiplying zero-padded rows of x, and (being to the right of all
        # valid lanes) they never contaminate valid-lane prefix sums.

        lane8 = lax.broadcasted_iota(jnp.int32, (8, sp), 1)

        def shift_up(v, k):
            # v[:, j] -> v[:, j - k], zero fill for j < k.  Single XLU roll;
            # direction resolved once at trace time (roll_fwd is static).
            amt = k if roll_fwd else sp - k
            return jnp.where(lane8 >= k, pltpu.roll(v, amt, axis=1), 0.0)

        # Inclusive cumsum(a) via ceil(log2(S)) shift-and-add steps (XLU+VPU)
        # on a native (8, Sp) tile.
        b8 = jnp.broadcast_to(a_row, (8, sp))
        k = 1
        while k < seq_len:
            b8 = b8 + shift_up(b8, k)
            k *= 2
        prev8 = shift_up(b8, 1)              # exact b_{i-1}; 0 at i == 0

        b_row = b8[0:1, :]                   # (1, Sp)
        prev_row = prev8[0:1, :]             # (1, Sp)

        r = jnp.floor(b_row)                 # this_ind
        pr = jnp.floor(prev_row)             # prev_ind
        frac = b_row - r
        cross = r != pr                      # boundary crossed (this_ind = prev_ind + 1)

        mm = t_mat_ref.dtype
        main_v = jnp.where(cross, frac, a_row).astype(mm)   # value at row this_ind
        side_v = (a_row - frac).astype(mm)                  # value at row this_ind - 1

        # trans_mat in its natural orientation: sublane = output row, lane =
        # sequence position.  Float equality on integer-valued f32 is exact
        # for seq_len < 2**24.
        row_idx = lax.broadcasted_iota(jnp.float32, (n_rows, 1), 0)
        hit_r = row_idx == r                                 # (Sr, Sp)
        hit_r1 = (row_idx == (r - 1.0)) & cross
        zero = jnp.zeros((), mm)
        t_mat_ref[...] = jnp.where(hit_r, main_v,
                                   jnp.where(hit_r1, side_v, zero))

    # out tile = trans_mat @ x tile  (MXU-native, f32 accumulation).
    o_ref[...] = jnp.dot(t_mat_ref[...], x_ref[...],
                         preferred_element_type=jnp.float32).astype(o_ref.dtype)


def fitted_warp(x, w, *, matmul_dtype=jnp.bfloat16):
    """x: (B, S, D) batch of independent problems, w: (D, 1) parameter.

    Returns (B, S, D) f32.  The default bf16 matmul_dtype uses the fast MXU
    path for the dominant trans_mat @ x matmul (f32 accumulation; the warp
    matrix itself is always derived from f32 tmp1, so its structure is
    identical to the f32 path).  Pass matmul_dtype=jnp.float32 for strict
    numerical parity with the PyTorch reference.
    """
    B, S, D = x.shape
    Sp = _round_up(S, 128)                       # lane-mapped sequence axis
    Dp = _round_up(D, 128)                       # feature axis
    mm_dtype = jnp.dtype(matmul_dtype)
    sub = 32 // mm_dtype.itemsize                # 8 for f32, 16 for bf16
    Sr = _round_up(S, sub)                       # trans_mat rows / out sublanes

    # Feature tile: largest of (512, 256, 128) dividing Dp.
    TD = 128
    for cand in (512, 256, 128):
        if Dp % cand == 0:
            TD = min(cand, Dp)
            break
    nD = Dp // TD

    # tmp1 = x @ w, once, in f32 at HIGHEST precision (tiny, memory-bound).
    x32 = x.astype(jnp.float32)
    w_vec = jnp.reshape(w, (-1,)).astype(jnp.float32)
    tmp1 = jnp.einsum("bsd,d->bs", x32, w_vec,
                      precision=jax.lax.Precision.HIGHEST)[:, None, :]  # (B,1,S)
    if Sp != S:
        tmp1 = jnp.pad(tmp1, ((0, 0), (0, 0), (0, Sp - S)))

    # Pad / cast x once in the wrapper (guarded: aligned f32-free inputs copy
    # nothing; keep x permanently padded upstream if this op is called often).
    x_mm = x
    if Sp != S or Dp != D:
        x_mm = jnp.pad(x_mm, ((0, 0), (0, Sp - S), (0, Dp - D)))
    if x_mm.dtype != mm_dtype:
        x_mm = x_mm.astype(mm_dtype)

    mm_bytes = mm_dtype.itemsize
    vmem_est = (2 * Sp * TD * mm_bytes           # x block, double-buffered
                + 2 * Sr * TD * 4                # out block, double-buffered
                + 2 * Sp * 4                     # tmp1 block
                + Sr * Sp * mm_bytes             # trans_mat scratch
                + 4 * Sr * Sp * 4                # trans_mat build temporaries
                + 6 * 8 * Sp * 4)                # prefix-sum temporaries
    # Clamp at 64 MiB (v7x physical VMEM per TensorCore).
    vmem_limit = int(min(max(2 * vmem_est, 32 * 1024 * 1024), 64 * 1024 * 1024))

    cost = pl.CostEstimate(
        flops=2 * B * Sr * Sp * Dp,
        transcendentals=B * Sp,
        bytes_accessed=(x_mm.size * mm_bytes + tmp1.size * 4 + B * Sr * Dp * 4))

    kernel = functools.partial(_fitted_warp_kernel, seq_len=S,
                               roll_fwd=_roll_shift_is_forward())

    out = pl.pallas_call(
        kernel,
        out_shape=jax.ShapeDtypeStruct((B, Sr, Dp), jnp.float32),
        grid=(B, nD),
        in_specs=[
            pl.BlockSpec((None, 1, Sp), lambda b, d: (b, 0, 0)),    # tmp1 row
            pl.BlockSpec((None, Sp, TD), lambda b, d: (b, 0, d)),   # x tile
        ],
        out_specs=pl.BlockSpec((None, Sr, TD), lambda b, d: (b, 0, d)),
        scratch_shapes=[pltpu.VMEM((Sr, Sp), matmul_dtype)],        # trans_mat
        compiler_params=pltpu.CompilerParams(
            dimension_semantics=("parallel", "arbitrary"),
            vmem_limit_bytes=vmem_limit),
        cost_estimate=cost,
    )(tmp1, x_mm)

    if Sr != S or Dp != D:
        out = out[:, :S, :D]
    return out


def reference_forward(x, w):
    """NumPy port of the PyTorch forward (single problem), for verification."""
    x = np.asarray(x, np.float32)
    w = np.asarray(w, np.float32)
    tmp1 = x @ w
    a = 1.0 / (1.0 + np.exp(-tmp1))
    b = np.cumsum(a, axis=0)
    S = x.shape[0]
    M = np.zeros((S, S), np.float32)
    prev_ind = 0
    for i in range(S):
        ai = a[i, 0]
        bi = b[i, 0]
        this_ind = int(np.floor(bi))
        if this_ind == prev_ind:
            M[this_ind, i] = ai
        else:
            frac = bi - this_ind
            M[this_ind, i] = frac
            M[this_ind - 1, i] = ai - frac
        prev_ind = this_ind
    return M @ x


if __name__ == "__main__":
    B, S, D = 4, 8, 32                 # batch of problems, seq=8, hidden=32 -> w (32, 1)
    key = jax.random.PRNGKey(0)
    kx, kw = jax.random.split(key)
    x = jax.random.normal(kx, (B, S, D), dtype=jnp.float32)
    w = jax.random.normal(kw, (D, 1), dtype=jnp.float32)

    x_np = np.asarray(x)
    w_np = np.asarray(w)
    ref = np.stack([reference_forward(x_np[i], w_np) for i in range(B)])

    # Strict-parity path: f32 MXU operands.
    out_f32 = jax.block_until_ready(fitted_warp(x, w, matmul_dtype=jnp.float32))
    assert out_f32.shape == (B, S, D)
    if not np.allclose(np.asarray(out_f32), ref, atol=1e-4, rtol=1e-4):
        raise AssertionError("f32 Pallas kernel output does not match reference")

    # Default fast path: bf16 MXU operands, f32 accumulation.  The warp matrix
    # indices are still decided in f32, so only matmul rounding differs.
    out_bf16 = jax.block_until_ready(fitted_warp(x, w))
    assert out_bf16.shape == (B, S, D)
    if not np.allclose(np.asarray(out_bf16), ref, atol=1e-1, rtol=1e-1):
        raise AssertionError("bf16 Pallas kernel output does not match reference")

    print("KERNEL_OK")
</pallas_src>

<mosaic_0001>
module attributes {stable_mosaic.version = 11 : i64} {
  func.func @probe_kernel(%arg0: memref<8x128xf32, #tpu.memory_space<vmem>>, %arg1: memref<8x128xf32, #tpu.memory_space<vmem>>) attributes {dimension_semantics = [], scalar_prefetch = 0 : i64, scratch_operands = 0 : i64, tpu.core_type = #tpu.core_type<tc>} {
    %c0 = arith.constant 0 : index
    %c0_0 = arith.constant 0 : index
    %0 = vector.load %arg0[%c0, %c0_0] : memref<8x128xf32, #tpu.memory_space<vmem>>, vector<8x128xf32>
    %c1_i32 = arith.constant 1 : i32
    %1 = tpu.dynamic_rotate %0 by %c1_i32 dim 1 : vector<8x128xf32>, i32 -> vector<8x128xf32>
    %c0_1 = arith.constant 0 : index
    %c0_2 = arith.constant 0 : index
    %2 = vector.load %arg1[%c0_1, %c0_2] : memref<8x128xf32, #tpu.memory_space<vmem>>, vector<8x128xf32>
    tpu.vector_store %arg1[%c0_1, %c0_2], %1 {strides = array<i32>} : memref<8x128xf32, #tpu.memory_space<vmem>>, vector<8x128xf32>,
    return
  }
}

</mosaic_0001>

<llo_original>
// kernel: tpu_custom_call.1
$region0: #{tpu_custom_call.1}
  #allocation0 [shape = 'u32[]', space=smem, size = 0x4, offset = 0x4, fixed_abs, tag = 'smem constant byte address 0x4 - core index']
  #allocation1 [shape = 'u32[144,128]{1,0:T(1,128)}', space=vmem, size = 0x12000, scoped, tag = 'internal scratch']
  %s0 = inlined_call_operand.hbm [shape: f32[8,128], index: 0, kind: input, shape index: {}]
  %s1 = inlined_call_operand.hbm [shape: f32[8,128], index: 1, kind: output, shape index: {}]
  %s2 = sld [smem:[#allocation0]]
  $region18: #{tpu_custom_call.1} parent=0
    _
  %s4 = ssub.s32 1, %s2
  %s5 = scalar_select 0, %s4, %s2
  $region1: #{tpu_custom_call.1} parent=0
    #allocation2 [shape = 'u8[4096]{0}', space=vmem, size = 0x1000, scoped, tag = 'input window, operand 0, single buffered']
    #allocation3 [shape = 's32[1]{0}', space=sflag, size = 0x4, scoped, tag = 'scoped memory for tpu_custom_call.1']
    #allocation4 [shape = 's32[1]{0}', space=sflag, size = 0x4, scoped, tag = 'scoped memory for tpu_custom_call.1']
    #allocation5 [shape = 'u8[4096]{0}', space=vmem, size = 0x1000, scoped, tag = 'output window, operand 0, single buffered']
    %6 = vsyncpa [#allocation3], 0
    %7 = vsyncpa [#allocation4], 0
    // Predicated region
    $region2: #{tpu_custom_call.1} parent=1 // pred_check
      _
    $region3: #{tpu_custom_call.1} parent=1 // pred_check_branch
      %9 = sbr.rel (0) target = $region5
    $region4: #{tpu_custom_call.1} parent=1 // pred_region
      %s11 = ssub.s32 128, 128
      %12 = vsyncadd [#allocation3], %s11
      %s14 = sshll.u32 [#allocation2], 4
      %s15 = int_to_ptr.vmem [resolvable:$true] %s14
      %17 = dma.hbm_to_vmem [thread:$0]  %s0, 128, %s15, [#allocation3]
    $region5: #{tpu_custom_call.1} parent=1 // pred_fallthru
      _
    // Predicated region
    $region6: #{tpu_custom_call.1} parent=1 // pred_check
      _
    $region7: #{tpu_custom_call.1} parent=1 // pred_check_branch
      %19 = sbr.rel (0) target = $region9
    $region8: #{tpu_custom_call.1} parent=1 // pred_region
      %20 = dma.done [#allocation3], 128
    $region9: #{tpu_custom_call.1} parent=1 // pred_fallthru
      _
    %v21 = vld [vmem:[#allocation2] sm:$0xff]
    %22 = vrot.lane.b32.xlu0 %v21, 1
    %v23 = vpop.permute.xlu0 %22
    %24 = vst [vmem:[#allocation5] sm:$0xff] %v23
    // Predicated region
    $region10: #{tpu_custom_call.1} parent=1 // pred_check
      _
    $region11: #{tpu_custom_call.1} parent=1 // pred_check_branch
      %26 = sbr.rel (0) target = $region13
    $region12: #{tpu_custom_call.1} parent=1 // pred_region
      %s28 = ssub.s32 128, 128
      %29 = vsyncadd [#allocation4], %s28
      %s31 = sshll.u32 [#allocation5], 4
      %s32 = int_to_ptr.vmem [resolvable:$true] %s31
      %34 = dma.vmem_to_hbm [thread:$0]  %s32, 128, %s1, [#allocation4]
    $region13: #{tpu_custom_call.1} parent=1 // pred_fallthru
      _
    // Predicated region
    $region14: #{tpu_custom_call.1} parent=1 // pred_check
      _
    $region15: #{tpu_custom_call.1} parent=1 // pred_check_branch
      %36 = sbr.rel (0) target = $region17
    $region16: #{tpu_custom_call.1} parent=1 // pred_region
      %37 = dma.done [#allocation4], 128
    $region17: #{tpu_custom_call.1} parent=1 // pred_fallthru
      _
    %38 = vsyncpa [#allocation3], 1
    %39 = vsyncpa [#allocation4], 1

</llo_original>
